<compile_context>
chip_gen: v6e
topology: v6e:2x2x1
jax: 0.10.0
libtpu: 0.0.40
codegen_flags: <defaults>
</compile_context>

<pallas_src>
import jax
import jax.numpy as jnp
from jax.experimental import pallas as pl
from jax.experimental.pallas import tpu as pltpu

_OUT_LANES = 128  # lane-dense output width (avoids masked lane-width-1 stores)


def _trend_predictor_kernel(x_ref, w_ih_ref, w_hh_ref, b_ref, w_fc_ref, b_fc_ref, out_ref):
    """Full LSTM recurrence + final Linear + sigmoid, all inside one kernel.

    x_ref    : (T*B_pad, F)  bfloat16, VMEM  (time-major, flattened; row t*B_pad + b)
    w_ih_ref : (F, 4H)       bfloat16, VMEM  (gate order i, f, g, o — PyTorch convention)
    w_hh_ref : (H, 4H)       bfloat16, VMEM
    b_ref    : (1, 4H)       float32,  VMEM  (bias_ih + bias_hh, pre-summed)
    w_fc_ref : (1, H)        float32,  VMEM
    b_fc_ref : (1, 1)        float32,  SMEM  (scalar, read on the scalar path)
    out_ref  : (B_pad, 128)  float32,  VMEM  (sigmoid prob broadcast across lanes)
    """
    B = out_ref.shape[0]                 # padded batch (multiple of 8)
    T = x_ref.shape[0] // B
    H = w_hh_ref.shape[0]

    w_hh = w_hh_ref[...]                 # (H, 4H) bf16, resident for the whole recurrence

    # ---- (1) Hoisted input projection: ONE (T*B_pad, F) @ (F, 4H) MXU matmul, bias folded in.
    #          Stays a traced value (a few vregs) — no VMEM round trip.
    gates_x = (jnp.dot(x_ref[...], w_ih_ref[...],
                       preferred_element_type=jnp.float32) + b_ref[...])     # (T*B_pad, 4H) f32

    # ---- (2) Serial recurrence: only h @ W_hh (bf16 MXU, f32 acc) + elementwise on the chain.
    h = jnp.zeros((B, H), jnp.float32)
    c = jnp.zeros((B, H), jnp.float32)
    for t in range(T):                   # static full unroll; t is a Python int ->
        #                                  gates_x slice below is an aligned, free vreg view.
        gates = gates_x[t * B:(t + 1) * B, :] + jnp.dot(
            h.astype(w_hh.dtype), w_hh, preferred_element_type=jnp.float32)  # (B, 4H)
        # Two full-vreg EUP activations instead of four sliced ones.
        sg = jax.nn.sigmoid(gates)
        tg = jnp.tanh(gates)
        i_g = sg[:, 0 * H:1 * H]
        f_g = sg[:, 1 * H:2 * H]
        g_g = tg[:, 2 * H:3 * H]
        o_g = sg[:, 3 * H:4 * H]
        # TODO(synk): gate lane-rotates sit on the serial chain; a replicated-c layout could
        #             remove ~3 rotates/step — measure before committing (XLU has slack here).
        c = f_g * c + i_g * g_g
        h = o_g * jnp.tanh(c)

    # Dropout(p=0.1): identity at inference time (deterministic eval-mode semantics).
    # ---- (3) Final Linear(H, 1) + sigmoid: VPU multiply + lane reduction (no N=1 MXU pass).
    logit = jnp.sum(h * w_fc_ref[...], axis=-1, keepdims=True) + b_fc_ref[0, 0]
    prob = jax.nn.sigmoid(logit)                                              # (B, 1)
    # ---- (4) Lane-dense store; wrapper slices [:B, :1].
    out_ref[...] = jnp.broadcast_to(prob, out_ref.shape)


@jax.jit
def trend_predictor_forward(x_btf, w_ih, w_hh, b_ih, b_hh, w_fc, b_fc):
    """x_btf: (B, T, F) float32 — same layout as the PyTorch module (batch_first)."""
    B, T, F = x_btf.shape
    H = w_hh.shape[1]  # PyTorch weight_hh_l0 is (4H, H)

    # Pad batch to a sublane-tile multiple so every per-step slice in the kernel is aligned.
    B_pad = max(8, ((B + 7) // 8) * 8)
    x_p = jnp.pad(x_btf, ((0, B_pad - B), (0, 0), (0, 0)))

    # Glue in plain JAX: time-major + flatten, pre-transpose weights, fuse biases, bf16 cast.
    # TODO(synk): at production T*B*F, fuse this transpose into the producer or let a T-blocked
    #             BlockSpec handle time-major access instead of a separate XLA transpose.
    x_flat = jnp.transpose(x_p, (1, 0, 2)).reshape(T * B_pad, F).astype(jnp.bfloat16)
    w_ih_t = jnp.transpose(w_ih).astype(jnp.bfloat16)                 # (F, 4H)
    w_hh_t = jnp.transpose(w_hh).astype(jnp.bfloat16)                 # (H, 4H)
    b = (b_ih + b_hh).reshape(1, 4 * H).astype(jnp.float32)           # (1, 4H)
    w_fc_row = w_fc.reshape(1, H).astype(jnp.float32)                 # (1, H)
    b_fc_2d = b_fc.reshape(1, 1).astype(jnp.float32)                  # (1, 1) -> SMEM scalar

    vmem = pl.BlockSpec(memory_space=pltpu.MemorySpace.VMEM)
    smem = pl.BlockSpec(memory_space=pltpu.MemorySpace.SMEM)

    out = pl.pallas_call(
        _trend_predictor_kernel,
        out_shape=jax.ShapeDtypeStruct((B_pad, _OUT_LANES), jnp.float32),
        in_specs=[vmem, vmem, vmem, vmem, vmem, smem],
        out_specs=vmem,
    )(x_flat, w_ih_t, w_hh_t, b, w_fc_row, b_fc_2d)
    return out[:B, :1]   # (B, 1), matching the PyTorch module output


def _reference_forward(x, w_ih, w_hh, b_ih, b_hh, w_fc, b_fc):
    """Pure-JAX f32 reference (PyTorch LSTM semantics, eval-mode dropout)."""
    B, T, F = x.shape
    H = w_hh.shape[1]

    def step(carry, x_t):
        h, c = carry
        gates = x_t @ w_ih.T + h @ w_hh.T + b_ih + b_hh
        i, f, g, o = jnp.split(gates, 4, axis=-1)
        c = jax.nn.sigmoid(f) * c + jax.nn.sigmoid(i) * jnp.tanh(g)
        h = jax.nn.sigmoid(o) * jnp.tanh(c)
        return (h, c), None

    h0 = jnp.zeros((B, H), jnp.float32)
    c0 = jnp.zeros((B, H), jnp.float32)
    (h_last, _), _ = jax.lax.scan(step, (h0, c0), jnp.transpose(x, (1, 0, 2)))
    return jax.nn.sigmoid(h_last @ w_fc.T + b_fc)


def init_params(key, num_features, hidden_size):
    """Deterministic synthetic params matching PyTorch nn.LSTM / nn.Linear shapes."""
    H, F = hidden_size, num_features
    ks = jax.random.split(key, 6)
    bound = 1.0 / jnp.sqrt(jnp.float32(H))
    u = lambda k, shape: jax.random.uniform(k, shape, jnp.float32, -bound, bound)
    w_ih = u(ks[0], (4 * H, F))   # LSTM weight_ih_l0
    w_hh = u(ks[1], (4 * H, H))   # LSTM weight_hh_l0
    b_ih = u(ks[2], (4 * H,))     # LSTM bias_ih_l0
    b_hh = u(ks[3], (4 * H,))     # LSTM bias_hh_l0
    w_fc = u(ks[4], (1, H))       # nn.Linear(hidden_size, 1).weight
    b_fc = u(ks[5], (1,))         # nn.Linear(hidden_size, 1).bias
    return w_ih, w_hh, b_ih, b_hh, w_fc, b_fc


if __name__ == "__main__":
    batch, seq, num_features, hidden_size = 2, 8, 4, 32

    key = jax.random.PRNGKey(0)
    k_x, k_p = jax.random.split(key)
    x = jax.random.normal(k_x, (batch, seq, num_features), jnp.float32)
    params = init_params(k_p, num_features, hidden_size)

    out = trend_predictor_forward(x, *params)
    out = jax.block_until_ready(out)
    assert out.shape == (batch, 1), out.shape
    assert bool(jnp.all((out >= 0.0) & (out <= 1.0)))

    # f32 reference tolerance check (guards the bf16 MXU-operand drift through the recurrence).
    ref = _reference_forward(x, *params)
    assert bool(jnp.all(jnp.abs(out - ref) < 5e-2)), (out, ref)

    print("KERNEL_OK")
</pallas_src>

<mosaic_0001>
module attributes {stable_mosaic.version = 11 : i64} {
  func.func @_trend_predictor_kernel(%arg0: memref<64x4xbf16, #tpu.memory_space<vmem>>, %arg1: memref<4x128xbf16, #tpu.memory_space<vmem>>, %arg2: memref<32x128xbf16, #tpu.memory_space<vmem>>, %arg3: memref<1x128xf32, #tpu.memory_space<vmem>>, %arg4: memref<1x32xf32, #tpu.memory_space<vmem>>, %arg5: memref<1x1xf32, #tpu.memory_space<smem>>, %arg6: memref<8x128xf32, #tpu.memory_space<vmem>>) attributes {dimension_semantics = [], scalar_prefetch = 0 : i64, scratch_operands = 0 : i64, tpu.core_type = #tpu.core_type<tc>} {
    %c0 = arith.constant 0 : index
    %c0_0 = arith.constant 0 : index
    %0 = vector.load %arg2[%c0, %c0_0] : memref<32x128xbf16, #tpu.memory_space<vmem>>, vector<32x128xbf16>
    %c0_1 = arith.constant 0 : index
    %c0_2 = arith.constant 0 : index
    %1 = vector.load %arg0[%c0_1, %c0_2] : memref<64x4xbf16, #tpu.memory_space<vmem>>, vector<64x4xbf16>
    %c0_3 = arith.constant 0 : index
    %c0_4 = arith.constant 0 : index
    %2 = vector.load %arg1[%c0_3, %c0_4] : memref<4x128xbf16, #tpu.memory_space<vmem>>, vector<4x128xbf16>
    %cst = arith.constant dense<0.000000e+00> : vector<64x128xf32>
    %3 = tpu.matmul %1, %2, %cst {dimension_numbers = #tpu.dot_dimension_numbers<[1], [0], [0], [1], [0, 0, 1, 1], [], []>} : vector<64x4xbf16>, vector<4x128xbf16>, vector<64x128xf32> -> vector<64x128xf32>
    %c0_5 = arith.constant 0 : index
    %c0_6 = arith.constant 0 : index
    %4 = vector.load %arg3[%c0_5, %c0_6] : memref<1x128xf32, #tpu.memory_space<vmem>>, vector<1x128xf32>
    %5 = vector.broadcast %4 : vector<1x128xf32> to vector<64x128xf32>
    %6 = arith.addf %3, %5 : vector<64x128xf32>
    %cst_7 = arith.constant 0.000000e+00 : f32
    %7 = vector.broadcast %cst_7 : f32 to vector<8x32xf32>
    %cst_8 = arith.constant 0.000000e+00 : f32
    %8 = vector.broadcast %cst_8 : f32 to vector<8x32xf32>
    %9 = vector.extract_strided_slice %6 {offsets = [0, 0], sizes = [8, 128], strides = [1, 1]} : vector<64x128xf32> to vector<8x128xf32>
    %10 = arith.truncf %7 : vector<8x32xf32> to vector<8x32xbf16>
    %cst_9 = arith.constant dense<0.000000e+00> : vector<8x128xf32>
    %11 = tpu.matmul %10, %0, %cst_9 {dimension_numbers = #tpu.dot_dimension_numbers<[1], [0], [0], [1], [0, 0, 1, 1], [], []>} : vector<8x32xbf16>, vector<32x128xbf16>, vector<8x128xf32> -> vector<8x128xf32>
    %12 = arith.addf %9, %11 : vector<8x128xf32>
    %13 = arith.negf %12 : vector<8x128xf32>
    %14 = math.exp %13 : vector<8x128xf32>
    %cst_10 = arith.constant 1.000000e+00 : f32
    %15 = vector.broadcast %cst_10 : f32 to vector<8x128xf32>
    %16 = arith.addf %15, %14 : vector<8x128xf32>
    %17 = arith.divf %15, %16 : vector<8x128xf32>
    %18 = math.tanh %12 : vector<8x128xf32>
    %19 = vector.extract_strided_slice %17 {offsets = [0, 0], sizes = [8, 32], strides = [1, 1]} : vector<8x128xf32> to vector<8x32xf32>
    %20 = vector.extract_strided_slice %17 {offsets = [0, 32], sizes = [8, 32], strides = [1, 1]} : vector<8x128xf32> to vector<8x32xf32>
    %21 = vector.extract_strided_slice %18 {offsets = [0, 64], sizes = [8, 32], strides = [1, 1]} : vector<8x128xf32> to vector<8x32xf32>
    %22 = vector.extract_strided_slice %17 {offsets = [0, 96], sizes = [8, 32], strides = [1, 1]} : vector<8x128xf32> to vector<8x32xf32>
    %23 = arith.mulf %20, %8 : vector<8x32xf32>
    %24 = arith.mulf %19, %21 : vector<8x32xf32>
    %25 = arith.addf %23, %24 : vector<8x32xf32>
    %26 = math.tanh %25 : vector<8x32xf32>
    %27 = arith.mulf %22, %26 : vector<8x32xf32>
    %28 = vector.extract_strided_slice %6 {offsets = [8, 0], sizes = [8, 128], strides = [1, 1]} : vector<64x128xf32> to vector<8x128xf32>
    %29 = arith.truncf %27 : vector<8x32xf32> to vector<8x32xbf16>
    %cst_11 = arith.constant dense<0.000000e+00> : vector<8x128xf32>
    %30 = tpu.matmul %29, %0, %cst_11 {dimension_numbers = #tpu.dot_dimension_numbers<[1], [0], [0], [1], [0, 0, 1, 1], [], []>} : vector<8x32xbf16>, vector<32x128xbf16>, vector<8x128xf32> -> vector<8x128xf32>
    %31 = arith.addf %28, %30 : vector<8x128xf32>
    %32 = arith.negf %31 : vector<8x128xf32>
    %33 = math.exp %32 : vector<8x128xf32>
    %cst_12 = arith.constant 1.000000e+00 : f32
    %34 = vector.broadcast %cst_12 : f32 to vector<8x128xf32>
    %35 = arith.addf %34, %33 : vector<8x128xf32>
    %36 = arith.divf %34, %35 : vector<8x128xf32>
    %37 = math.tanh %31 : vector<8x128xf32>
    %38 = vector.extract_strided_slice %36 {offsets = [0, 0], sizes = [8, 32], strides = [1, 1]} : vector<8x128xf32> to vector<8x32xf32>
    %39 = vector.extract_strided_slice %36 {offsets = [0, 32], sizes = [8, 32], strides = [1, 1]} : vector<8x128xf32> to vector<8x32xf32>
    %40 = vector.extract_strided_slice %37 {offsets = [0, 64], sizes = [8, 32], strides = [1, 1]} : vector<8x128xf32> to vector<8x32xf32>
    %41 = vector.extract_strided_slice %36 {offsets = [0, 96], sizes = [8, 32], strides = [1, 1]} : vector<8x128xf32> to vector<8x32xf32>
    %42 = arith.mulf %39, %25 : vector<8x32xf32>
    %43 = arith.mulf %38, %40 : vector<8x32xf32>
    %44 = arith.addf %42, %43 : vector<8x32xf32>
    %45 = math.tanh %44 : vector<8x32xf32>
    %46 = arith.mulf %41, %45 : vector<8x32xf32>
    %47 = vector.extract_strided_slice %6 {offsets = [16, 0], sizes = [8, 128], strides = [1, 1]} : vector<64x128xf32> to vector<8x128xf32>
    %48 = arith.truncf %46 : vector<8x32xf32> to vector<8x32xbf16>
    %cst_13 = arith.constant dense<0.000000e+00> : vector<8x128xf32>
    %49 = tpu.matmul %48, %0, %cst_13 {dimension_numbers = #tpu.dot_dimension_numbers<[1], [0], [0], [1], [0, 0, 1, 1], [], []>} : vector<8x32xbf16>, vector<32x128xbf16>, vector<8x128xf32> -> vector<8x128xf32>
    %50 = arith.addf %47, %49 : vector<8x128xf32>
    %51 = arith.negf %50 : vector<8x128xf32>
    %52 = math.exp %51 : vector<8x128xf32>
    %cst_14 = arith.constant 1.000000e+00 : f32
    %53 = vector.broadcast %cst_14 : f32 to vector<8x128xf32>
    %54 = arith.addf %53, %52 : vector<8x128xf32>
    %55 = arith.divf %53, %54 : vector<8x128xf32>
    %56 = math.tanh %50 : vector<8x128xf32>
    %57 = vector.extract_strided_slice %55 {offsets = [0, 0], sizes = [8, 32], strides = [1, 1]} : vector<8x128xf32> to vector<8x32xf32>
    %58 = vector.extract_strided_slice %55 {offsets = [0, 32], sizes = [8, 32], strides = [1, 1]} : vector<8x128xf32> to vector<8x32xf32>
    %59 = vector.extract_strided_slice %56 {offsets = [0, 64], sizes = [8, 32], strides = [1, 1]} : vector<8x128xf32> to vector<8x32xf32>
    %60 = vector.extract_strided_slice %55 {offsets = [0, 96], sizes = [8, 32], strides = [1, 1]} : vector<8x128xf32> to vector<8x32xf32>
    %61 = arith.mulf %58, %44 : vector<8x32xf32>
    %62 = arith.mulf %57, %59 : vector<8x32xf32>
    %63 = arith.addf %61, %62 : vector<8x32xf32>
    %64 = math.tanh %63 : vector<8x32xf32>
    %65 = arith.mulf %60, %64 : vector<8x32xf32>
    %66 = vector.extract_strided_slice %6 {offsets = [24, 0], sizes = [8, 128], strides = [1, 1]} : vector<64x128xf32> to vector<8x128xf32>
    %67 = arith.truncf %65 : vector<8x32xf32> to vector<8x32xbf16>
    %cst_15 = arith.constant dense<0.000000e+00> : vector<8x128xf32>
    %68 = tpu.matmul %67, %0, %cst_15 {dimension_numbers = #tpu.dot_dimension_numbers<[1], [0], [0], [1], [0, 0, 1, 1], [], []>} : vector<8x32xbf16>, vector<32x128xbf16>, vector<8x128xf32> -> vector<8x128xf32>
    %69 = arith.addf %66, %68 : vector<8x128xf32>
    %70 = arith.negf %69 : vector<8x128xf32>
    %71 = math.exp %70 : vector<8x128xf32>
    %cst_16 = arith.constant 1.000000e+00 : f32
    %72 = vector.broadcast %cst_16 : f32 to vector<8x128xf32>
    %73 = arith.addf %72, %71 : vector<8x128xf32>
    %74 = arith.divf %72, %73 : vector<8x128xf32>
    %75 = math.tanh %69 : vector<8x128xf32>
    %76 = vector.extract_strided_slice %74 {offsets = [0, 0], sizes = [8, 32], strides = [1, 1]} : vector<8x128xf32> to vector<8x32xf32>
    %77 = vector.extract_strided_slice %74 {offsets = [0, 32], sizes = [8, 32], strides = [1, 1]} : vector<8x128xf32> to vector<8x32xf32>
    %78 = vector.extract_strided_slice %75 {offsets = [0, 64], sizes = [8, 32], strides = [1, 1]} : vector<8x128xf32> to vector<8x32xf32>
    %79 = vector.extract_strided_slice %74 {offsets = [0, 96], sizes = [8, 32], strides = [1, 1]} : vector<8x128xf32> to vector<8x32xf32>
    %80 = arith.mulf %77, %63 : vector<8x32xf32>
    %81 = arith.mulf %76, %78 : vector<8x32xf32>
    %82 = arith.addf %80, %81 : vector<8x32xf32>
    %83 = math.tanh %82 : vector<8x32xf32>
    %84 = arith.mulf %79, %83 : vector<8x32xf32>
    %85 = vector.extract_strided_slice %6 {offsets = [32, 0], sizes = [8, 128], strides = [1, 1]} : vector<64x128xf32> to vector<8x128xf32>
    %86 = arith.truncf %84 : vector<8x32xf32> to vector<8x32xbf16>
    %cst_17 = arith.constant dense<0.000000e+00> : vector<8x128xf32>
    %87 = tpu.matmul %86, %0, %cst_17 {dimension_numbers = #tpu.dot_dimension_numbers<[1], [0], [0], [1], [0, 0, 1, 1], [], []>} : vector<8x32xbf16>, vector<32x128xbf16>, vector<8x128xf32> -> vector<8x128xf32>
    %88 = arith.addf %85, %87 : vector<8x128xf32>
    %89 = arith.negf %88 : vector<8x128xf32>
    %90 = math.exp %89 : vector<8x128xf32>
    %cst_18 = arith.constant 1.000000e+00 : f32
    %91 = vector.broadcast %cst_18 : f32 to vector<8x128xf32>
    %92 = arith.addf %91, %90 : vector<8x128xf32>
    %93 = arith.divf %91, %92 : vector<8x128xf32>
    %94 = math.tanh %88 : vector<8x128xf32>
    %95 = vector.extract_strided_slice %93 {offsets = [0, 0], sizes = [8, 32], strides = [1, 1]} : vector<8x128xf32> to vector<8x32xf32>
    %96 = vector.extract_strided_slice %93 {offsets = [0, 32], sizes = [8, 32], strides = [1, 1]} : vector<8x128xf32> to vector<8x32xf32>
    %97 = vector.extract_strided_slice %94 {offsets = [0, 64], sizes = [8, 32], strides = [1, 1]} : vector<8x128xf32> to vector<8x32xf32>
    %98 = vector.extract_strided_slice %93 {offsets = [0, 96], sizes = [8, 32], strides = [1, 1]} : vector<8x128xf32> to vector<8x32xf32>
    %99 = arith.mulf %96, %82 : vector<8x32xf32>
    %100 = arith.mulf %95, %97 : vector<8x32xf32>
    %101 = arith.addf %99, %100 : vector<8x32xf32>
    %102 = math.tanh %101 : vector<8x32xf32>
    %103 = arith.mulf %98, %102 : vector<8x32xf32>
    %104 = vector.extract_strided_slice %6 {offsets = [40, 0], sizes = [8, 128], strides = [1, 1]} : vector<64x128xf32> to vector<8x128xf32>
    %105 = arith.truncf %103 : vector<8x32xf32> to vector<8x32xbf16>
    %cst_19 = arith.constant dense<0.000000e+00> : vector<8x128xf32>
    %106 = tpu.matmul %105, %0, %cst_19 {dimension_numbers = #tpu.dot_dimension_numbers<[1], [0], [0], [1], [0, 0, 1, 1], [], []>} : vector<8x32xbf16>, vector<32x128xbf16>, vector<8x128xf32> -> vector<8x128xf32>
    %107 = arith.addf %104, %106 : vector<8x128xf32>
    %108 = arith.negf %107 : vector<8x128xf32>
    %109 = math.exp %108 : vector<8x128xf32>
    %cst_20 = arith.constant 1.000000e+00 : f32
    %110 = vector.broadcast %cst_20 : f32 to vector<8x128xf32>
    %111 = arith.addf %110, %109 : vector<8x128xf32>
    %112 = arith.divf %110, %111 : vector<8x128xf32>
    %113 = math.tanh %107 : vector<8x128xf32>
    %114 = vector.extract_strided_slice %112 {offsets = [0, 0], sizes = [8, 32], strides = [1, 1]} : vector<8x128xf32> to vector<8x32xf32>
    %115 = vector.extract_strided_slice %112 {offsets = [0, 32], sizes = [8, 32], strides = [1, 1]} : vector<8x128xf32> to vector<8x32xf32>
    %116 = vector.extract_strided_slice %113 {offsets = [0, 64], sizes = [8, 32], strides = [1, 1]} : vector<8x128xf32> to vector<8x32xf32>
    %117 = vector.extract_strided_slice %112 {offsets = [0, 96], sizes = [8, 32], strides = [1, 1]} : vector<8x128xf32> to vector<8x32xf32>
    %118 = arith.mulf %115, %101 : vector<8x32xf32>
    %119 = arith.mulf %114, %116 : vector<8x32xf32>
    %120 = arith.addf %118, %119 : vector<8x32xf32>
    %121 = math.tanh %120 : vector<8x32xf32>
    %122 = arith.mulf %117, %121 : vector<8x32xf32>
    %123 = vector.extract_strided_slice %6 {offsets = [48, 0], sizes = [8, 128], strides = [1, 1]} : vector<64x128xf32> to vector<8x128xf32>
    %124 = arith.truncf %122 : vector<8x32xf32> to vector<8x32xbf16>
    %cst_21 = arith.constant dense<0.000000e+00> : vector<8x128xf32>
    %125 = tpu.matmul %124, %0, %cst_21 {dimension_numbers = #tpu.dot_dimension_numbers<[1], [0], [0], [1], [0, 0, 1, 1], [], []>} : vector<8x32xbf16>, vector<32x128xbf16>, vector<8x128xf32> -> vector<8x128xf32>
    %126 = arith.addf %123, %125 : vector<8x128xf32>
    %127 = arith.negf %126 : vector<8x128xf32>
    %128 = math.exp %127 : vector<8x128xf32>
    %cst_22 = arith.constant 1.000000e+00 : f32
    %129 = vector.broadcast %cst_22 : f32 to vector<8x128xf32>
    %130 = arith.addf %129, %128 : vector<8x128xf32>
    %131 = arith.divf %129, %130 : vector<8x128xf32>
    %132 = math.tanh %126 : vector<8x128xf32>
    %133 = vector.extract_strided_slice %131 {offsets = [0, 0], sizes = [8, 32], strides = [1, 1]} : vector<8x128xf32> to vector<8x32xf32>
    %134 = vector.extract_strided_slice %131 {offsets = [0, 32], sizes = [8, 32], strides = [1, 1]} : vector<8x128xf32> to vector<8x32xf32>
    %135 = vector.extract_strided_slice %132 {offsets = [0, 64], sizes = [8, 32], strides = [1, 1]} : vector<8x128xf32> to vector<8x32xf32>
    %136 = vector.extract_strided_slice %131 {offsets = [0, 96], sizes = [8, 32], strides = [1, 1]} : vector<8x128xf32> to vector<8x32xf32>
    %137 = arith.mulf %134, %120 : vector<8x32xf32>
    %138 = arith.mulf %133, %135 : vector<8x32xf32>
    %139 = arith.addf %137, %138 : vector<8x32xf32>
    %140 = math.tanh %139 : vector<8x32xf32>
    %141 = arith.mulf %136, %140 : vector<8x32xf32>
    %142 = vector.extract_strided_slice %6 {offsets = [56, 0], sizes = [8, 128], strides = [1, 1]} : vector<64x128xf32> to vector<8x128xf32>
    %143 = arith.truncf %141 : vector<8x32xf32> to vector<8x32xbf16>
    %cst_23 = arith.constant dense<0.000000e+00> : vector<8x128xf32>
    %144 = tpu.matmul %143, %0, %cst_23 {dimension_numbers = #tpu.dot_dimension_numbers<[1], [0], [0], [1], [0, 0, 1, 1], [], []>} : vector<8x32xbf16>, vector<32x128xbf16>, vector<8x128xf32> -> vector<8x128xf32>
    %145 = arith.addf %142, %144 : vector<8x128xf32>
    %146 = arith.negf %145 : vector<8x128xf32>
    %147 = math.exp %146 : vector<8x128xf32>
    %cst_24 = arith.constant 1.000000e+00 : f32
    %148 = vector.broadcast %cst_24 : f32 to vector<8x128xf32>
    %149 = arith.addf %148, %147 : vector<8x128xf32>
    %150 = arith.divf %148, %149 : vector<8x128xf32>
    %151 = math.tanh %145 : vector<8x128xf32>
    %152 = vector.extract_strided_slice %150 {offsets = [0, 0], sizes = [8, 32], strides = [1, 1]} : vector<8x128xf32> to vector<8x32xf32>
    %153 = vector.extract_strided_slice %150 {offsets = [0, 32], sizes = [8, 32], strides = [1, 1]} : vector<8x128xf32> to vector<8x32xf32>
    %154 = vector.extract_strided_slice %151 {offsets = [0, 64], sizes = [8, 32], strides = [1, 1]} : vector<8x128xf32> to vector<8x32xf32>
    %155 = vector.extract_strided_slice %150 {offsets = [0, 96], sizes = [8, 32], strides = [1, 1]} : vector<8x128xf32> to vector<8x32xf32>
    %156 = arith.mulf %153, %139 : vector<8x32xf32>
    %157 = arith.mulf %152, %154 : vector<8x32xf32>
    %158 = arith.addf %156, %157 : vector<8x32xf32>
    %159 = math.tanh %158 : vector<8x32xf32>
    %160 = arith.mulf %155, %159 : vector<8x32xf32>
    %c0_25 = arith.constant 0 : index
    %c0_26 = arith.constant 0 : index
    %161 = vector.load %arg4[%c0_25, %c0_26] : memref<1x32xf32, #tpu.memory_space<vmem>>, vector<1x32xf32>
    %162 = vector.broadcast %161 : vector<1x32xf32> to vector<8x32xf32>
    %163 = arith.mulf %160, %162 : vector<8x32xf32>
    %cst_27 = arith.constant dense<0.000000e+00> : vector<8xf32>
    %164 = vector.multi_reduction <add>, %163, %cst_27 [1] : vector<8x32xf32> to vector<8xf32>
    %165 = vector.shape_cast %164 : vector<8xf32> to vector<8x1xf32>
    %c0_28 = arith.constant 0 : index
    %c0_29 = arith.constant 0 : index
    %166 = memref.load %arg5[%c0_28, %c0_29] : memref<1x1xf32, #tpu.memory_space<smem>>
    %167 = vector.broadcast %166 : f32 to vector<8x1xf32>
    %168 = arith.addf %165, %167 : vector<8x1xf32>
    %169 = arith.negf %168 : vector<8x1xf32>
    %170 = math.exp %169 : vector<8x1xf32>
    %cst_30 = arith.constant 1.000000e+00 : f32
    %171 = vector.broadcast %cst_30 : f32 to vector<8x1xf32>
    %172 = arith.addf %171, %170 : vector<8x1xf32>
    %173 = arith.divf %171, %172 : vector<8x1xf32>
    %174 = vector.shape_cast %173 : vector<8x1xf32> to vector<8x1xf32>
    %175 = vector.broadcast %174 : vector<8x1xf32> to vector<8x128xf32>
    %c0_31 = arith.constant 0 : index
    %c0_32 = arith.constant 0 : index
    %176 = vector.load %arg6[%c0_31, %c0_32] : memref<8x128xf32, #tpu.memory_space<vmem>>, vector<8x128xf32>
    tpu.vector_store %arg6[%c0_31, %c0_32], %175 {strides = array<i32>} : memref<8x128xf32, #tpu.memory_space<vmem>>, vector<8x128xf32>,
    return
  }
}

</mosaic_0001>

<llo_original>
// kernel: trend_predictor_forward.1
$region0: #{trend_predictor_forward.1}
  #allocation0 [shape = 'u32[]', space=smem, size = 0x4, offset = 0x4, fixed_abs, tag = 'smem constant byte address 0x4 - core index']
  #allocation1 [shape = 'u32[144,128]{1,0:T(1,128)}', space=vmem, size = 0x12000, scoped, tag = 'internal scratch']
  #allocation2 [shape = 'f32[1,1]{1,0:T(1,128)S(6)}', space=smem, size = 0x200, scoped, tag = 'scoped memory for trend_predictor_forward.1']
  %s0 = inlined_call_operand.vmem [shape: bf16[64,4], index: 0, kind: input, shape index: {}]
  %s1 = inlined_call_operand.vmem [shape: bf16[4,128], index: 1, kind: input, shape index: {}]
  %s2 = inlined_call_operand.vmem [shape: bf16[32,128], index: 2, kind: input, shape index: {}]
  %s3 = inlined_call_operand.vmem [shape: f32[1,128], index: 3, kind: input, shape index: {}]
  %s4 = inlined_call_operand.vmem [shape: f32[1,32], index: 4, kind: input, shape index: {}]
  %s5 = inlined_call_operand.<no memory space> [shape: f32[1,1], index: 5, kind: input, shape index: {}]
  %s6 = inlined_call_operand.vmem [shape: f32[8,128], index: 6, kind: output, shape index: {}]
  %s7 = sld [smem:[#allocation0]]
  $region34: #{trend_predictor_forward.1} parent=0
    _
  %s9 = ssub.s32 1, %s7
  %s10 = scalar_select 0, %s9, %s7
  %11 = sst [smem:[#allocation2]] %s5
  // Predicated region
  $region2: #{trend_predictor_forward.1} parent=0 // pred_check
    _
  $region3: #{trend_predictor_forward.1} parent=0 // pred_check_branch
    %13 = sbr.rel (0) target = $region5
  $region4: #{trend_predictor_forward.1} parent=0 // pred_region
    _
  $region5: #{trend_predictor_forward.1} parent=0 // pred_fallthru
    _
  // Predicated region
  $region6: #{trend_predictor_forward.1} parent=0 // pred_check
    _
  $region7: #{trend_predictor_forward.1} parent=0 // pred_check_branch
    %15 = sbr.rel (0) target = $region9
  $region8: #{trend_predictor_forward.1} parent=0 // pred_region
    _
  $region9: #{trend_predictor_forward.1} parent=0 // pred_fallthru
    _
  // Predicated region
  $region10: #{trend_predictor_forward.1} parent=0 // pred_check
    _
  $region11: #{trend_predictor_forward.1} parent=0 // pred_check_branch
    %17 = sbr.rel (0) target = $region13
  $region12: #{trend_predictor_forward.1} parent=0 // pred_region
    _
  $region13: #{trend_predictor_forward.1} parent=0 // pred_fallthru
    _
  // Predicated region
  $region14: #{trend_predictor_forward.1} parent=0 // pred_check
    _
  $region15: #{trend_predictor_forward.1} parent=0 // pred_check_branch
    %19 = sbr.rel (0) target = $region17
  $region16: #{trend_predictor_forward.1} parent=0 // pred_region
    _
  $region17: #{trend_predictor_forward.1} parent=0 // pred_fallthru
    _
  // Predicated region
  $region18: #{trend_predictor_forward.1} parent=0 // pred_check
    _
  $region19: #{trend_predictor_forward.1} parent=0 // pred_check_branch
    %21 = sbr.rel (0) target = $region21
  $region20: #{trend_predictor_forward.1} parent=0 // pred_region
    _
  $region21: #{trend_predictor_forward.1} parent=0 // pred_fallthru
    _
  // Predicated region
  $region22: #{trend_predictor_forward.1} parent=0 // pred_check
    _
  $region23: #{trend_predictor_forward.1} parent=0 // pred_check_branch
    %23 = sbr.rel (0) target = $region25
  $region24: #{trend_predictor_forward.1} parent=0 // pred_region
    _
  $region25: #{trend_predictor_forward.1} parent=0 // pred_fallthru
    _
  %v25 = vld [vmem:[%s2] sm:$0xf]
  %v26 = vld [vmem:[%s2 + $0x4] sm:$0xf]
  %v27 = vld [vmem:[%s2 + $0x8] sm:$0xf]
  %v28 = vld [vmem:[%s2 + $0xc] sm:$0xf]
  %v29 = vld [vmem:[%s0] sm:$0xf]
  %v30 = vld [vmem:[%s0 + $0x4] sm:$0xf]
  %v31 = vld [vmem:[%s0 + $0x8] sm:$0xf]
  %v32 = vld [vmem:[%s0 + $0xc] sm:$0xf]
  %v33 = vld [vmem:[%s0 + $0x10] sm:$0xf]
  %v34 = vld [vmem:[%s0 + $0x14] sm:$0xf]
  %v35 = vld [vmem:[%s0 + $0x18] sm:$0xf]
  %v36 = vld [vmem:[%s0 + $0x1c] sm:$0xf]
  %v37 = vld [vmem:[%s1] sm:$0x3]
  %v38 = vld [vmem:[%s3] sm:$0x1]
  %v40 = vlaneseq
  %v41 = vshrl.u32 %v40, 7
  %v42 = vsub.s32 0, %v41
  %v43 = vrot.slane %v38, %v42
  %v53 = vunpack.c.l.b16 %v29
  %v54 = vunpack.c.l.b16 %v30
  %v55 = vunpack.c.l.b16 %v31
  %v56 = vunpack.c.l.b16 %v32
  %v57 = vunpack.c.l.b16 %v33
  %v58 = vunpack.c.l.b16 %v34
  %v59 = vunpack.c.l.b16 %v35
  %v60 = vunpack.c.l.b16 %v36
  %v61 = vpack.c.b16 %v54, %v53
  %v62 = vpack.c.b16 %v56, %v55
  %v63 = vpack.c.b16 %v58, %v57
  %v64 = vpack.c.b16 %v60, %v59
  %vm65 = vcmask 31744
  %v67 = vsel %vm65, %v61, 0
  %v70 = vsel %vm65, %v62, 0
  %v73 = vsel %vm65, %v63, 0
  %v76 = vsel %vm65, %v64, 0
  %vm78 = vcmask 1041408
  %v80 = vsel %vm78, %v37, 0
  %82 = vmatprep.subr.bf16.mxu0 0
  %83 = vmatpush1.bf16.msra.mxu0 0
  %84 = vmatprep.subr.bf16.mxu0 0
  %85 = vmatpush1.bf16.msra.mxu0 0
  %86 = vmatprep.subr.bf16.mxu0 0
  %87 = vmatpush1.bf16.msra.mxu0 0
  %88 = vmatprep.subr.bf16.mxu0 0
  %89 = vmatpush1.bf16.msra.mxu0 0
  %90 = vmatprep.subr.bf16.mxu0 0
  %91 = vmatpush1.bf16.msra.mxu0 0
  %92 = vmatprep.subr.bf16.mxu0 0
  %93 = vmatpush1.bf16.msra.mxu0 0
  %94 = vmatprep.subr.bf16.mxu0 0
  %95 = vmatpush1.bf16.msra.mxu0 0
  %96 = vmatprep.subr.bf16.mxu0 0
  %97 = vmatpush1.bf16.msra.mxu0 %v80
  %98 = vmatprep.subr.bf16.mxu0 0
  %99 = vmatpush2.bf16.msra.mxu0 0
  %100 = vmatprep.subr.bf16.mxu0 0
  %101 = vmatpush2.bf16.msra.mxu0 0
  %102 = vmatprep.subr.bf16.mxu0 0
  %103 = vmatpush2.bf16.msra.mxu0 0
  %104 = vmatprep.subr.bf16.mxu0 0
  %105 = vmatpush2.bf16.msra.mxu0 0
  %106 = vmatprep.subr.bf16.mxu0 0
  %107 = vmatpush2.bf16.msra.mxu0 0
  %108 = vmatprep.subr.bf16.mxu0 0
  %109 = vmatpush2.bf16.msra.mxu0 0
  %110 = vmatprep.subr.bf16.mxu0 0
  %111 = vmatpush2.bf16.msra.mxu0 0
  %112 = vmatprep.subr.bf16.mxu0 0
  %113 = vmatpush2.bf16.msra.mxu0 0
  %114 = vmatprep.mubr.bf16.mxu0 0
  %115 = vmatmul.mubr.bf16.gmra.mxu0 %v67
  %v116 = vpop.f32.mrf.mxu0
  %v117 = vadd.f32 %v43, %v116
  %v118 = vpop.f32.mrf.mxu0
  %v119 = vpop.f32.mrf.mxu0
  %v120 = vadd.f32 %v43, %v119
  %v121 = vpop.f32.mrf.mxu0
  %122 = vmatprep.mubr.bf16.mxu0 0
  %123 = vmatmul.mubr.bf16.gmra.mxu0 %v70
  %v124 = vpop.f32.mrf.mxu0
  %v125 = vadd.f32 %v43, %v124
  %v126 = vpop.f32.mrf.mxu0
  %v127 = vpop.f32.mrf.mxu0
  %v128 = vadd.f32 %v43, %v127
  %v129 = vpop.f32.mrf.mxu0
  %130 = vmatprep.mubr.bf16.mxu0 0
  %131 = vmatmul.mubr.bf16.gmra.mxu0 %v73
  %v132 = vpop.f32.mrf.mxu0
  %v133 = vadd.f32 %v43, %v132
  %v134 = vpop.f32.mrf.mxu0
  %v135 = vpop.f32.mrf.mxu0
  %v136 = vadd.f32 %v43, %v135
  %v137 = vpop.f32.mrf.mxu0
  %138 = vmatprep.mubr.bf16.mxu0 0
  %139 = vmatmul.mubr.bf16.gmra.mxu0 %v76
  %v140 = vpop.f32.mrf.mxu0
  %v141 = vadd.f32 %v43, %v140
  %v142 = vpop.f32.mrf.mxu0
  %v143 = vpop.f32.mrf.mxu0
  %v144 = vadd.f32 %v43, %v143
  %v145 = vpop.f32.mrf.mxu0
  %146 = vdwg.mxu0
  %v151 = vunpack.c.l.b16 %v25
  %v152 = vunpack.c.l.b16 %v26
  %v153 = vunpack.c.l.b16 %v27
  %v154 = vunpack.c.l.b16 %v28
  %v155 = vpack.c.b16 %v152, %v151
  %v156 = vpack.c.b16 %v154, %v153
  %vm159 = vcmask 261120
  %v161 = vsel %vm159, 0, 0
  %163 = vmatprep.subr.bf16.mxu0 0
  %164 = vmatpush1.bf16.msra.mxu0 0
  %165 = vmatprep.subr.bf16.mxu0 0
  %166 = vmatpush1.bf16.msra.mxu0 0
  %167 = vmatprep.subr.bf16.mxu0 0
  %168 = vmatpush1.bf16.msra.mxu0 0
  %169 = vmatprep.subr.bf16.mxu0 0
  %170 = vmatpush1.bf16.msra.mxu0 0
  %171 = vmatprep.subr.bf16.mxu0 0
  %172 = vmatpush1.bf16.msra.mxu0 0
  %173 = vmatprep.subr.bf16.mxu0 0
  %174 = vmatpush1.bf16.msra.mxu0 0
  %175 = vmatprep.subr.bf16.mxu0 0
  %176 = vmatpush1.bf16.msra.mxu0 %v156
  %177 = vmatprep.subr.bf16.mxu0 0
  %178 = vmatpush1.bf16.msra.mxu0 %v155
  %179 = vmatprep.subr.bf16.mxu0 0
  %180 = vmatpush2.bf16.msra.mxu0 0
  %181 = vmatprep.subr.bf16.mxu0 0
  %182 = vmatpush2.bf16.msra.mxu0 0
  %183 = vmatprep.subr.bf16.mxu0 0
  %184 = vmatpush2.bf16.msra.mxu0 0
  %185 = vmatprep.subr.bf16.mxu0 0
  %186 = vmatpush2.bf16.msra.mxu0 0
  %187 = vmatprep.subr.bf16.mxu0 0
  %188 = vmatpush2.bf16.msra.mxu0 0
  %189 = vmatprep.subr.bf16.mxu0 0
  %190 = vmatpush2.bf16.msra.mxu0 0
  %191 = vmatprep.subr.bf16.mxu0 0
  %192 = vmatpush2.bf16.msra.mxu0 0
  %193 = vmatprep.subr.bf16.mxu0 0
  %194 = vmatpush2.bf16.msra.mxu0 0
  %195 = vmatprep.mubr.bf16.mxu0 0
  %196 = vmatmul.mubr.bf16.gmra.mxu0 %v161
  %v197 = vpop.f32.mrf.mxu0
  %v198 = vadd.f32 0.0, %v197
  %v199 = vpop.f32.mrf.mxu0
  %v200 = vpop.f32.mrf.mxu0
  %v201 = vpop.f32.mrf.mxu0
  %202 = vdwg.mxu0
  %v203 = vadd.f32 %v117, %v198
  %v204 = vxor.u32 %v203, 2147483648
  %v205 = vmul.f32 %v204, 1.442695
  %v206 = vpow.pop %v205
  %v207 = vadd.f32 %v206, 1.0
  %v208 = vrcp.pop %v207
  %v209 = vmul.f32 1.0, %v208
  %v210 = vtanh.pop %v203
  %v211 = vmul.f32 %v209, 0.0
  %213 = vrot.lane.b32.xlu0 %v210, 64
  %v214 = vpop.permute.xlu0 %213
  %v216 = vmul.f32 %v209, %v214
  %218 = vrot.lane.b32.xlu0 %v216, 32
  %v219 = vpop.permute.xlu0 %218
  %v221 = vadd.f32 %v211, %v219
  %v222 = vtanh.pop %v221
  %224 = vrot.lane.b32.xlu0 %v222, 64
  %v225 = vpop.permute.xlu0 %224
  %v227 = vmul.f32 %v209, %v225
  %v228 = vpack.c.bf16 %v227, %v227
  %230 = vrot.lane.b32.xlu0 %v228, 32
  %v231 = vpop.permute.xlu0 %230
  %v233 = vsel %vm159, %v231, 0
  %235 = vmatprep.subr.bf16.mxu0 0
  %236 = vmatpush1.bf16.msra.mxu0 0
  %237 = vmatprep.subr.bf16.mxu0 0
  %238 = vmatpush1.bf16.msra.mxu0 0
  %239 = vmatprep.subr.bf16.mxu0 0
  %240 = vmatpush1.bf16.msra.mxu0 0
  %241 = vmatprep.subr.bf16.mxu0 0
  %242 = vmatpush1.bf16.msra.mxu0 0
  %243 = vmatprep.subr.bf16.mxu0 0
  %244 = vmatpush1.bf16.msra.mxu0 0
  %245 = vmatprep.subr.bf16.mxu0 0
  %246 = vmatpush1.bf16.msra.mxu0 0
  %247 = vmatprep.subr.bf16.mxu0 0
  %248 = vmatpush1.bf16.msra.mxu0 %v156
  %249 = vmatprep.subr.bf16.mxu0 0
  %250 = vmatpush1.bf16.msra.mxu0 %v155
  %251 = vmatprep.subr.bf16.mxu0 0
  %252 = vmatpush2.bf16.msra.mxu0 0
  %253 = vmatprep.subr.bf16.mxu0 0
  %254 = vmatpush2.bf16.msra.mxu0 0
  %255 = vmatprep.subr.bf16.mxu0 0
  %256 = vmatpush2.bf16.msra.mxu0 0
  %257 = vmatprep.subr.bf16.mxu0 0
  %258 = vmatpush2.bf16.msra.mxu0 0
  %259 = vmatprep.subr.bf16.mxu0 0
  %260 = vmatpush2.bf16.msra.mxu0 0
  %261 = vmatprep.subr.bf16.mxu0 0
  %262 = vmatpush2.bf16.msra.mxu0 0
  %263 = vmatprep.subr.bf16.mxu0 0
  %264 = vmatpush2.bf16.msra.mxu0 0
  %265 = vmatprep.subr.bf16.mxu0 0
  %266 = vmatpush2.bf16.msra.mxu0 0
  %267 = vmatprep.mubr.bf16.mxu0 0
  %268 = vmatmul.mubr.bf16.gmra.mxu0 %v233
  %v269 = vpop.f32.mrf.mxu0
  %v270 = vadd.f32 0.0, %v269
  %v271 = vpop.f32.mrf.mxu0
  %v272 = vpop.f32.mrf.mxu0
  %v273 = vpop.f32.mrf.mxu0
  %274 = vdwg.mxu0
  %v275 = vadd.f32 %v120, %v270
  %v276 = vxor.u32 %v275, 2147483648
  %v277 = vmul.f32 %v276, 1.442695
  %v278 = vpow.pop %v277
  %v279 = vadd.f32 %v278, 1.0
  %v280 = vrcp.pop %v279
  %v281 = vmul.f32 1.0, %v280
  %v282 = vtanh.pop %v275
  %v283 = vmul.f32 %v281, %v221
  %285 = vrot.lane.b32.xlu0 %v282, 64
  %v286 = vpop.permute.xlu0 %285
  %v288 = vmul.f32 %v281, %v286
  %290 = vrot.lane.b32.xlu0 %v288, 32
  %v291 = vpop.permute.xlu0 %290
  %v293 = vadd.f32 %v283, %v291
  %v294 = vtanh.pop %v293
  %296 = vrot.lane.b32.xlu0 %v294, 64
  %v297 = vpop.permute.xlu0 %296
  %v299 = vmul.f32 %v281, %v297
  %v300 = vpack.c.bf16 %v299, %v299
  %302 = vrot.lane.b32.xlu0 %v300, 32
  %v303 = vpop.permute.xlu0 %302
  %v305 = vsel %vm159, %v303, 0
  %307 = vmatprep.subr.bf16.mxu0 0
  %308 = vmatpush1.bf16.msra.mxu0 0
  %309 = vmatprep.subr.bf16.mxu0 0
  %310 = vmatpush1.bf16.msra.mxu0 0
  %311 = vmatprep.subr.bf16.mxu0 0
  %312 = vmatpush1.bf16.msra.mxu0 0
  %313 = vmatprep.subr.bf16.mxu0 0
  %314 = vmatpush1.bf16.msra.mxu0 0
  %315 = vmatprep.subr.bf16.mxu0 0
  %316 = vmatpush1.bf16.msra.mxu0 0
  %317 = vmatprep.subr.bf16.mxu0 0
  %318 = vmatpush1.bf16.msra.mxu0 0
  %319 = vmatprep.subr.bf16.mxu0 0
  %320 = vmatpush1.bf16.msra.mxu0 %v156
  %321 = vmatprep.subr.bf16.mxu0 0
  %322 = vmatpush1.bf16.msra.mxu0 %v155
  %323 = vmatprep.subr.bf16.mxu0 0
  %324 = vmatpush2.bf16.msra.mxu0 0
  %325 = vmatprep.subr.bf16.mxu0 0
  %326 = vmatpush2.bf16.msra.mxu0 0
  %327 = vmatprep.subr.bf16.mxu0 0
  %328 = vmatpush2.bf16.msra.mxu0 0
  %329 = vmatprep.subr.bf16.mxu0 0
  %330 = vmatpush2.bf16.msra.mxu0 0
  %331 = vmatprep.subr.bf16.mxu0 0
  %332 = vmatpush2.bf16.msra.mxu0 0
  %333 = vmatprep.subr.bf16.mxu0 0
  %334 = vmatpush2.bf16.msra.mxu0 0
  %335 = vmatprep.subr.bf16.mxu0 0
  %336 = vmatpush2.bf16.msra.mxu0 0
  %337 = vmatprep.subr.bf16.mxu0 0
  %338 = vmatpush2.bf16.msra.mxu0 0
  %339 = vmatprep.mubr.bf16.mxu0 0
  %340 = vmatmul.mubr.bf16.gmra.mxu0 %v305
  %v341 = vpop.f32.mrf.mxu0
  %v342 = vadd.f32 0.0, %v341
  %v343 = vpop.f32.mrf.mxu0
  %v344 = vpop.f32.mrf.mxu0
  %v345 = vpop.f32.mrf.mxu0
  %346 = vdwg.mxu0
  %v347 = vadd.f32 %v125, %v342
  %v348 = vxor.u32 %v347, 2147483648
  %v349 = vmul.f32 %v348, 1.442695
  %v350 = vpow.pop %v349
  %v351 = vadd.f32 %v350, 1.0
  %v352 = vrcp.pop %v351
  %v353 = vmul.f32 1.0, %v352
  %v354 = vtanh.pop %v347
  %v355 = vmul.f32 %v353, %v293
  %357 = vrot.lane.b32.xlu0 %v354, 64
  %v358 = vpop.permute.xlu0 %357
  %v360 = vmul.f32 %v353, %v358
  %362 = vrot.lane.b32.xlu0 %v360, 32
  %v363 = vpop.permute.xlu0 %362
  %v365 = vadd.f32 %v355, %v363
  %v366 = vtanh.pop %v365
  %368 = vrot.lane.b32.xlu0 %v366, 64
  %v369 = vpop.permute.xlu0 %368
  %v371 = vmul.f32 %v353, %v369
  %v372 = vpack.c.bf16 %v371, %v371
  %374 = vrot.lane.b32.xlu0 %v372, 32
  %v375 = vpop.permute.xlu0 %374
  %v377 = vsel %vm159, %v375, 0
  %379 = vmatprep.subr.bf16.mxu0 0
  %380 = vmatpush1.bf16.msra.mxu0 0
  %381 = vmatprep.subr.bf16.mxu0 0
  %382 = vmatpush1.bf16.msra.mxu0 0
  %383 = vmatprep.subr.bf16.mxu0 0
  %384 = vmatpush1.bf16.msra.mxu0 0
  %385 = vmatprep.subr.bf16.mxu0 0
  %386 = vmatpush1.bf16.msra.mxu0 0
  %387 = vmatprep.subr.bf16.mxu0 0
  %388 = vmatpush1.bf16.msra.mxu0 0
  %389 = vmatprep.subr.bf16.mxu0 0
  %390 = vmatpush1.bf16.msra.mxu0 0
  %391 = vmatprep.subr.bf16.mxu0 0
  %392 = vmatpush1.bf16.msra.mxu0 %v156
  %393 = vmatprep.subr.bf16.mxu0 0
  %394 = vmatpush1.bf16.msra.mxu0 %v155
  %395 = vmatprep.subr.bf16.mxu0 0
  %396 = vmatpush2.bf16.msra.mxu0 0
  %397 = vmatprep.subr.bf16.mxu0 0
  %398 = vmatpush2.bf16.msra.mxu0 0
  %399 = vmatprep.subr.bf16.mxu0 0
  %400 = vmatpush2.bf16.msra.mxu0 0
  %401 = vmatprep.subr.bf16.mxu0 0
  %402 = vmatpush2.bf16.msra.mxu0 0
  %403 = vmatprep.subr.bf16.mxu0 0
  %404 = vmatpush2.bf16.msra.mxu0 0
  %405 = vmatprep.subr.bf16.mxu0 0
  %406 = vmatpush2.bf16.msra.mxu0 0
  %407 = vmatprep.subr.bf16.mxu0 0
  %408 = vmatpush2.bf16.msra.mxu0 0
  %409 = vmatprep.subr.bf16.mxu0 0
  %410 = vmatpush2.bf16.msra.mxu0 0
  %411 = vmatprep.mubr.bf16.mxu0 0
  %412 = vmatmul.mubr.bf16.gmra.mxu0 %v377
  %v413 = vpop.f32.mrf.mxu0
  %v414 = vadd.f32 0.0, %v413
  %v415 = vpop.f32.mrf.mxu0
  %v416 = vpop.f32.mrf.mxu0
  %v417 = vpop.f32.mrf.mxu0
  %418 = vdwg.mxu0
  %v419 = vadd.f32 %v128, %v414
  %v420 = vxor.u32 %v419, 2147483648
  %v421 = vmul.f32 %v420, 1.442695
  %v422 = vpow.pop %v421
  %v423 = vadd.f32 %v422, 1.0
  %v424 = vrcp.pop %v423
  %v425 = vmul.f32 1.0, %v424
  %v426 = vtanh.pop %v419
  %v427 = vmul.f32 %v425, %v365
  %429 = vrot.lane.b32.xlu0 %v426, 64
  %v430 = vpop.permute.xlu0 %429
  %v432 = vmul.f32 %v425, %v430
  %434 = vrot.lane.b32.xlu0 %v432, 32
  %v435 = vpop.permute.xlu0 %434
  %v437 = vadd.f32 %v427, %v435
  %v438 = vtanh.pop %v437
  %440 = vrot.lane.b32.xlu0 %v438, 64
  %v441 = vpop.permute.xlu0 %440
  %v443 = vmul.f32 %v425, %v441
  %v444 = vpack.c.bf16 %v443, %v443
  %446 = vrot.lane.b32.xlu0 %v444, 32
  %v447 = vpop.permute.xlu0 %446
  %v449 = vsel %vm159, %v447, 0
  %451 = vmatprep.subr.bf16.mxu0 0
  %452 = vmatpush1.bf16.msra.mxu0 0
  %453 = vmatprep.subr.bf16.mxu0 0
  %454 = vmatpush1.bf16.msra.mxu0 0
  %455 = vmatprep.subr.bf16.mxu0 0
  %456 = vmatpush1.bf16.msra.mxu0 0
  %457 = vmatprep.subr.bf16.mxu0 0
  %458 = vmatpush1.bf16.msra.mxu0 0
  %459 = vmatprep.subr.bf16.mxu0 0
  %460 = vmatpush1.bf16.msra.mxu0 0
  %461 = vmatprep.subr.bf16.mxu0 0
  %462 = vmatpush1.bf16.msra.mxu0 0
  %463 = vmatprep.subr.bf16.mxu0 0
  %464 = vmatpush1.bf16.msra.mxu0 %v156
  %465 = vmatprep.subr.bf16.mxu0 0
  %466 = vmatpush1.bf16.msra.mxu0 %v155
  %467 = vmatprep.subr.bf16.mxu0 0
  %468 = vmatpush2.bf16.msra.mxu0 0
  %469 = vmatprep.subr.bf16.mxu0 0
  %470 = vmatpush2.bf16.msra.mxu0 0
  %471 = vmatprep.subr.bf16.mxu0 0
  %472 = vmatpush2.bf16.msra.mxu0 0
  %473 = vmatprep.subr.bf16.mxu0 0
  %474 = vmatpush2.bf16.msra.mxu0 0
  %475 = vmatprep.subr.bf16.mxu0 0
  %476 = vmatpush2.bf16.msra.mxu0 0
  %477 = vmatprep.subr.bf16.mxu0 0
  %478 = vmatpush2.bf16.msra.mxu0 0
  %479 = vmatprep.subr.bf16.mxu0 0
  %480 = vmatpush2.bf16.msra.mxu0 0
  %481 = vmatprep.subr.bf16.mxu0 0
  %482 = vmatpush2.bf16.msra.mxu0 0
  %483 = vmatprep.mubr.bf16.mxu0 0
  %484 = vmatmul.mubr.bf16.gmra.mxu0 %v449
  %v485 = vpop.f32.mrf.mxu0
  %v486 = vadd.f32 0.0, %v485
  %v487 = vpop.f32.mrf.mxu0
  %v488 = vpop.f32.mrf.mxu0
  %v489 = vpop.f32.mrf.mxu0
  %490 = vdwg.mxu0
  %v491 = vadd.f32 %v133, %v486
  %v492 = vxor.u32 %v491, 2147483648
  %v493 = vmul.f32 %v492, 1.442695
  %v494 = vpow.pop %v493
  %v495 = vadd.f32 %v494, 1.0
  %v496 = vrcp.pop %v495
  %v497 = vmul.f32 1.0, %v496
  %v498 = vtanh.pop %v491
  %v499 = vmul.f32 %v497, %v437
  %501 = vrot.lane.b32.xlu0 %v498, 64
  %v502 = vpop.permute.xlu0 %501
  %v504 = vmul.f32 %v497, %v502
  %506 = vrot.lane.b32.xlu0 %v504, 32
  %v507 = vpop.permute.xlu0 %506
  %v509 = vadd.f32 %v499, %v507
  %v510 = vtanh.pop %v509
  %512 = vrot.lane.b32.xlu0 %v510, 64
  %v513 = vpop.permute.xlu0 %512
  %v515 = vmul.f32 %v497, %v513
  %v516 = vpack.c.bf16 %v515, %v515
  %518 = vrot.lane.b32.xlu0 %v516, 32
  %v519 = vpop.permute.xlu0 %518
  %v521 = vsel %vm159, %v519, 0
  %523 = vmatprep.subr.bf16.mxu0 0
  %524 = vmatpush1.bf16.msra.mxu0 0
  %525 = vmatprep.subr.bf16.mxu0 0
  %526 = vmatpush1.bf16.msra.mxu0 0
  %527 = vmatprep.subr.bf16.mxu0 0
  %528 = vmatpush1.bf16.msra.mxu0 0
  %529 = vmatprep.subr.bf16.mxu0 0
  %530 = vmatpush1.bf16.msra.mxu0 0
  %531 = vmatprep.subr.bf16.mxu0 0
  %532 = vmatpush1.bf16.msra.mxu0 0
  %533 = vmatprep.subr.bf16.mxu0 0
  %534 = vmatpush1.bf16.msra.mxu0 0
  %535 = vmatprep.subr.bf16.mxu0 0
  %536 = vmatpush1.bf16.msra.mxu0 %v156
  %537 = vmatprep.subr.bf16.mxu0 0
  %538 = vmatpush1.bf16.msra.mxu0 %v155
  %539 = vmatprep.subr.bf16.mxu0 0
  %540 = vmatpush2.bf16.msra.mxu0 0
  %541 = vmatprep.subr.bf16.mxu0 0
  %542 = vmatpush2.bf16.msra.mxu0 0
  %543 = vmatprep.subr.bf16.mxu0 0
  %544 = vmatpush2.bf16.msra.mxu0 0
  %545 = vmatprep.subr.bf16.mxu0 0
  %546 = vmatpush2.bf16.msra.mxu0 0
  %547 = vmatprep.subr.bf16.mxu0 0
  %548 = vmatpush2.bf16.msra.mxu0 0
  %549 = vmatprep.subr.bf16.mxu0 0
  %550 = vmatpush2.bf16.msra.mxu0 0
  %551 = vmatprep.subr.bf16.mxu0 0
  %552 = vmatpush2.bf16.msra.mxu0 0
  %553 = vmatprep.subr.bf16.mxu0 0
  %554 = vmatpush2.bf16.msra.mxu0 0
  %555 = vmatprep.mubr.bf16.mxu0 0
  %556 = vmatmul.mubr.bf16.gmra.mxu0 %v521
  %v557 = vpop.f32.mrf.mxu0
  %v558 = vadd.f32 0.0, %v557
  %v559 = vpop.f32.mrf.mxu0
  %v560 = vpop.f32.mrf.mxu0
  %v561 = vpop.f32.mrf.mxu0
  %562 = vdwg.mxu0
  %v563 = vadd.f32 %v136, %v558
  %v564 = vxor.u32 %v563, 2147483648
  %v565 = vmul.f32 %v564, 1.442695
  %v566 = vpow.pop %v565
  %v567 = vadd.f32 %v566, 1.0
  %v568 = vrcp.pop %v567
  %v569 = vmul.f32 1.0, %v568
  %v570 = vtanh.pop %v563
  %v571 = vmul.f32 %v569, %v509
  %573 = vrot.lane.b32.xlu0 %v570, 64
  %v574 = vpop.permute.xlu0 %573
  %v576 = vmul.f32 %v569, %v574
  %578 = vrot.lane.b32.xlu0 %v576, 32
  %v579 = vpop.permute.xlu0 %578
  %v581 = vadd.f32 %v571, %v579
  %v582 = vtanh.pop %v581
  %584 = vrot.lane.b32.xlu0 %v582, 64
  %v585 = vpop.permute.xlu0 %584
  %v587 = vmul.f32 %v569, %v585
  %v588 = vpack.c.bf16 %v587, %v587
  %590 = vrot.lane.b32.xlu0 %v588, 32
  %v591 = vpop.permute.xlu0 %590
  %v593 = vsel %vm159, %v591, 0
  %595 = vmatprep.subr.bf16.mxu0 0
  %596 = vmatpush1.bf16.msra.mxu0 0
  %597 = vmatprep.subr.bf16.mxu0 0
  %598 = vmatpush1.bf16.msra.mxu0 0
  %599 = vmatprep.subr.bf16.mxu0 0
  %600 = vmatpush1.bf16.msra.mxu0 0
  %601 = vmatprep.subr.bf16.mxu0 0
  %602 = vmatpush1.bf16.msra.mxu0 0
  %603 = vmatprep.subr.bf16.mxu0 0
  %604 = vmatpush1.bf16.msra.mxu0 0
  %605 = vmatprep.subr.bf16.mxu0 0
  %606 = vmatpush1.bf16.msra.mxu0 0
  %607 = vmatprep.subr.bf16.mxu0 0
  %608 = vmatpush1.bf16.msra.mxu0 %v156
  %609 = vmatprep.subr.bf16.mxu0 0
  %610 = vmatpush1.bf16.msra.mxu0 %v155
  %611 = vmatprep.subr.bf16.mxu0 0
  %612 = vmatpush2.bf16.msra.mxu0 0
  %613 = vmatprep.subr.bf16.mxu0 0
  %614 = vmatpush2.bf16.msra.mxu0 0
  %615 = vmatprep.subr.bf16.mxu0 0
  %616 = vmatpush2.bf16.msra.mxu0 0
  %617 = vmatprep.subr.bf16.mxu0 0
  %618 = vmatpush2.bf16.msra.mxu0 0
  %619 = vmatprep.subr.bf16.mxu0 0
  %620 = vmatpush2.bf16.msra.mxu0 0
  %621 = vmatprep.subr.bf16.mxu0 0
  %622 = vmatpush2.bf16.msra.mxu0 0
  %623 = vmatprep.subr.bf16.mxu0 0
  %624 = vmatpush2.bf16.msra.mxu0 0
  %625 = vmatprep.subr.bf16.mxu0 0
  %626 = vmatpush2.bf16.msra.mxu0 0
  %627 = vmatprep.mubr.bf16.mxu0 0
  %628 = vmatmul.mubr.bf16.gmra.mxu0 %v593
  %v629 = vpop.f32.mrf.mxu0
  %v630 = vadd.f32 0.0, %v629
  %v631 = vpop.f32.mrf.mxu0
  %v632 = vpop.f32.mrf.mxu0
  %v633 = vpop.f32.mrf.mxu0
  %634 = vdwg.mxu0
  %v635 = vadd.f32 %v141, %v630
  %v636 = vxor.u32 %v635, 2147483648
  %v637 = vmul.f32 %v636, 1.442695
  %v638 = vpow.pop %v637
  %v639 = vadd.f32 %v638, 1.0
  %v640 = vrcp.pop %v639
  %v641 = vmul.f32 1.0, %v640
  %v642 = vtanh.pop %v635
  %v643 = vmul.f32 %v641, %v581
  %645 = vrot.lane.b32.xlu0 %v642, 64
  %v646 = vpop.permute.xlu0 %645
  %v648 = vmul.f32 %v641, %v646
  %650 = vrot.lane.b32.xlu0 %v648, 32
  %v651 = vpop.permute.xlu0 %650
  %v653 = vadd.f32 %v643, %v651
  %v654 = vtanh.pop %v653
  %656 = vrot.lane.b32.xlu0 %v654, 64
  %v657 = vpop.permute.xlu0 %656
  %v659 = vmul.f32 %v641, %v657
  %v660 = vpack.c.bf16 %v659, %v659
  %662 = vrot.lane.b32.xlu0 %v660, 32
  %v663 = vpop.permute.xlu0 %662
  %v665 = vsel %vm159, %v663, 0
  %667 = vmatprep.subr.bf16.mxu0 0
  %668 = vmatpush1.bf16.msra.mxu0 0
  %669 = vmatprep.subr.bf16.mxu0 0
  %670 = vmatpush1.bf16.msra.mxu0 0
  %671 = vmatprep.subr.bf16.mxu0 0
  %672 = vmatpush1.bf16.msra.mxu0 0
  %673 = vmatprep.subr.bf16.mxu0 0
  %674 = vmatpush1.bf16.msra.mxu0 0
  %675 = vmatprep.subr.bf16.mxu0 0
  %676 = vmatpush1.bf16.msra.mxu0 0
  %677 = vmatprep.subr.bf16.mxu0 0
  %678 = vmatpush1.bf16.msra.mxu0 0
  %679 = vmatprep.subr.bf16.mxu0 0
  %680 = vmatpush1.bf16.msra.mxu0 %v156
  %681 = vmatprep.subr.bf16.mxu0 0
  %682 = vmatpush1.bf16.msra.mxu0 %v155
  %683 = vmatprep.subr.bf16.mxu0 0
  %684 = vmatpush2.bf16.msra.mxu0 0
  %685 = vmatprep.subr.bf16.mxu0 0
  %686 = vmatpush2.bf16.msra.mxu0 0
  %687 = vmatprep.subr.bf16.mxu0 0
  %688 = vmatpush2.bf16.msra.mxu0 0
  %689 = vmatprep.subr.bf16.mxu0 0
  %690 = vmatpush2.bf16.msra.mxu0 0
  %691 = vmatprep.subr.bf16.mxu0 0
  %692 = vmatpush2.bf16.msra.mxu0 0
  %693 = vmatprep.subr.bf16.mxu0 0
  %694 = vmatpush2.bf16.msra.mxu0 0
  %695 = vmatprep.subr.bf16.mxu0 0
  %696 = vmatpush2.bf16.msra.mxu0 0
  %697 = vmatprep.subr.bf16.mxu0 0
  %698 = vmatpush2.bf16.msra.mxu0 0
  %699 = vmatprep.mubr.bf16.mxu0 0
  %700 = vmatmul.mubr.bf16.gmra.mxu0 %v665
  %v701 = vpop.f32.mrf.mxu0
  %v702 = vadd.f32 0.0, %v701
  %v703 = vpop.f32.mrf.mxu0
  %v704 = vpop.f32.mrf.mxu0
  %v705 = vpop.f32.mrf.mxu0
  %706 = vdwg.mxu0
  %v707 = vadd.f32 %v144, %v702
  %v708 = vxor.u32 %v707, 2147483648
  %v709 = vmul.f32 %v708, 1.442695
  %v710 = vpow.pop %v709
  %v711 = vadd.f32 %v710, 1.0
  %v712 = vrcp.pop %v711
  %v713 = vmul.f32 1.0, %v712
  %v714 = vtanh.pop %v707
  %v715 = vmul.f32 %v713, %v653
  %717 = vrot.lane.b32.xlu0 %v714, 64
  %v718 = vpop.permute.xlu0 %717
  %v720 = vmul.f32 %v713, %v718
  %722 = vrot.lane.b32.xlu0 %v720, 32
  %v723 = vpop.permute.xlu0 %722
  %v725 = vadd.f32 %v715, %v723
  %v726 = vtanh.pop %v725
  %728 = vrot.lane.b32.xlu0 %v726, 64
  %v729 = vpop.permute.xlu0 %728
  %v731 = vmul.f32 %v713, %v729
  %v732 = vld [vmem:[%s4] sm:$0x1]
  %v734 = vlaneseq
  %v735 = vshrl.u32 %v734, 7
  %v736 = vsub.s32 0, %v735
  %v737 = vrot.slane %v732, %v736
  %738 = vrot.lane.b32.xlu0 %v737, 96
  %v739 = vpop.permute.xlu0 %738
  %v741 = vmul.f32 %v731, %v739
  %743 = vrot.lane.b32.xlu0 %v741, 32
  %v744 = vpop.permute.xlu0 %743
  %v746 = vsel %vm159, %v744, 0.0
  %747 = vadd.xlane.f32.xlu0 %v746
  %v748 = vpop.xlane.xlu0 %747
  %s749 = sld [smem:[#allocation2]]
  %v750 = vstv %s749
  %v751 = vadd.f32 %v748, %v750
  %v752 = vxor.u32 %v751, 2147483648
  %v753 = vmul.f32 %v752, 1.442695
  %v754 = vpow.pop %v753
  %v755 = vadd.f32 %v754, 1.0
  %v756 = vrcp.pop %v755
  %v757 = vmul.f32 1.0, %v756
  %758 = vst [vmem:[%s6] sm:$0xff] %v757
  // Predicated region
  $region26: #{trend_predictor_forward.1} parent=0 // pred_check
    _
  $region27: #{trend_predictor_forward.1} parent=0 // pred_check_branch
    %760 = sbr.rel (0) target = $region29
  $region28: #{trend_predictor_forward.1} parent=0 // pred_region
    _
  $region29: #{trend_predictor_forward.1} parent=0 // pred_fallthru
    _
  // Predicated region
  $region30: #{trend_predictor_forward.1} parent=0 // pred_check
    _
  $region31: #{trend_predictor_forward.1} parent=0 // pred_check_branch
    %762 = sbr.rel (0) target = $region33
  $region32: #{trend_predictor_forward.1} parent=0 // pred_region
    _
  $region33: #{trend_predictor_forward.1} parent=0 // pred_fallthru
    _

</llo_original>
